<compile_context>
chip_gen: v7x
topology: tpu7x:2x2x1
jax: 0.10.0
libtpu: 0.0.40
codegen_flags: <defaults>
</compile_context>

<pallas_src>
import functools

import jax
import jax.numpy as jnp
from jax.experimental import pallas as pl
from jax.experimental.pallas import tpu as pltpu

LANE = 128        # lane width; hidden and label axes are padded to a multiple of this
SUBLANE = 8       # f32 sublane multiple for batch tiles
NEG_BIG = -1.0e30  # "effectively -inf" bias for padded label columns (exp underflows to 0)


def _round_up(n, m):
    return ((n + m - 1) // m) * m


def _num_tensorcores():
    """v7x has 2 TensorCores per chip; v5e/v6e have 1. Used only to pick the grid."""
    try:
        kind = jax.devices()[0].device_kind.lower()
    except Exception:
        return 1
    return 2 if "v7" in kind else 1


def mlp_kernel(x_ref, w1_ref, b1_ref, w2_ref, b2_ref, o_ref):
    # fc1: cast activations to bf16 in-kernel (VPU), MXU matmul with f32 accumulation,
    # bias add + ReLU in f32. Padded hidden columns have zero weights/bias -> stay 0.
    x = x_ref[...].astype(jnp.bfloat16)
    h = jnp.dot(x, w1_ref[...], preferred_element_type=jnp.float32)
    h = jnp.maximum(h + b1_ref[...], 0.0)

    # fc2: bf16 MXU inputs, f32 accumulation, f32 bias. Padded label columns carry a
    # -1e30 bias so exp() underflows to exactly 0 below.
    logits = jnp.dot(h.astype(jnp.bfloat16), w2_ref[...],
                     preferred_element_type=jnp.float32) + b2_ref[...]

    # Softmax over the lane-dense (128-wide) padded label axis.
    m = jnp.max(logits, axis=1, keepdims=True)
    e = jnp.exp(logits - m)
    denom = jnp.sum(e, axis=1, keepdims=True)
    o_ref[...] = (e * pl.reciprocal(denom, approx=True)).astype(o_ref.dtype)


def prepare_params(w1, b1, w2, b2):
    """One-time weight prep: pad hidden & label axes to 128 lanes, cast matmul weights to bf16.

    Call once; reuse the returned arrays across every forward pass.
    """
    input_size, hidden = w1.shape
    num_labels = w2.shape[1]
    hpad = _round_up(hidden, LANE)
    lpad = _round_up(num_labels, LANE)

    w1_p = jnp.zeros((input_size, hpad), jnp.float32).at[:, :hidden].set(w1)
    w1_p = w1_p.astype(jnp.bfloat16)
    b1_p = jnp.zeros((1, hpad), jnp.float32).at[0, :hidden].set(b1)

    w2_p = jnp.zeros((hpad, lpad), jnp.float32).at[:hidden, :num_labels].set(w2)
    w2_p = w2_p.astype(jnp.bfloat16)
    b2_p = jnp.full((1, lpad), NEG_BIG, jnp.float32).at[0, :num_labels].set(b2)
    return w1_p, b1_p, w2_p, b2_p


@functools.partial(jax.jit, static_argnames=("num_labels", "num_tiles"))
def mlp_forward(x, w1_p, b1_p, w2_p, b2_p, *, num_labels, num_tiles=1):
    """Returns softmax(relu(x @ w1 + b1) @ w2 + b2) with shape [batch, num_labels] (f32)."""
    batch, input_size = x.shape
    hpad = w1_p.shape[1]
    lpad = w2_p.shape[1]

    # One batch tile per TensorCore (num_tiles=1 on v5e/v6e, 2 on v7x); each tile's row
    # count is rounded up to a sublane multiple. Zero-padded rows are sliced off below.
    n_tiles = min(num_tiles, batch // SUBLANE) if batch >= SUBLANE else 1
    n_tiles = max(n_tiles, 1)
    rows = _round_up(pl.cdiv(batch, n_tiles), SUBLANE)
    bpad = rows * n_tiles
    if bpad != batch:
        x = jnp.pad(x, ((0, bpad - batch), (0, 0)))

    out = pl.pallas_call(
        mlp_kernel,
        out_shape=jax.ShapeDtypeStruct((bpad, lpad), jnp.bfloat16),
        grid_spec=pltpu.PrefetchScalarGridSpec(
            num_scalar_prefetch=0,
            grid=(n_tiles,),
            in_specs=[
                # activations: tiled along batch (f32; cast to bf16 inside the kernel)
                pl.BlockSpec((rows, input_size), lambda i: (i, 0)),
                # weights / biases: constant block index -> DMA'd once, VMEM-resident
                pl.BlockSpec((input_size, hpad), lambda i: (0, 0)),
                pl.BlockSpec((1, hpad), lambda i: (0, 0)),
                pl.BlockSpec((hpad, lpad), lambda i: (0, 0)),
                pl.BlockSpec((1, lpad), lambda i: (0, 0)),
            ],
            out_specs=pl.BlockSpec((rows, lpad), lambda i: (i, 0)),
        ),
        compiler_params=pltpu.CompilerParams(
            # shard batch tiles across TensorCores on v7x; no-op with a single tile
            dimension_semantics=("parallel",),
        ),
    )(x, w1_p, b1_p, w2_p, b2_p)

    # slice off batch/label padding, return f32 probabilities
    return out[:batch, :num_labels].astype(jnp.float32)


if __name__ == "__main__":
    # config: input_size=32, hidden_size=64, num_labels=10 (dropout declared but unused
    # in MLP.forward(), so omitted).
    batch, input_size, hidden_size, num_labels = 200, 32, 64, 10

    key = jax.random.PRNGKey(0)
    kx, kw1, kb1, kw2, kb2 = jax.random.split(key, 5)

    x = jax.random.normal(kx, (batch, input_size), dtype=jnp.float32)
    # deterministic "Linear"-style init (uniform in +/- 1/sqrt(fan_in))
    lim1 = 1.0 / jnp.sqrt(jnp.float32(input_size))
    lim2 = 1.0 / jnp.sqrt(jnp.float32(hidden_size))
    w1 = jax.random.uniform(kw1, (input_size, hidden_size), jnp.float32, -lim1, lim1)
    b1 = jax.random.uniform(kb1, (hidden_size,), jnp.float32, -lim1, lim1)
    w2 = jax.random.uniform(kw2, (hidden_size, num_labels), jnp.float32, -lim2, lim2)
    b2 = jax.random.uniform(kb2, (num_labels,), jnp.float32, -lim2, lim2)

    # --- one-time weight prep (amortized across forwards) ---
    params = prepare_params(w1, b1, w2, b2)
    params = jax.block_until_ready(params)

    n_tc = _num_tensorcores()
    out = jax.block_until_ready(
        mlp_forward(x, *params, num_labels=num_labels, num_tiles=n_tc))
    assert out.shape == (batch, num_labels)

    # Reference mirroring the kernel's bf16 matmul inputs with f32 accumulation
    # (tolerance also covers the bf16 output store + approximate EUP reciprocal).
    xb = x.astype(jnp.bfloat16).astype(jnp.float32)
    w1b = w1.astype(jnp.bfloat16).astype(jnp.float32)
    w2b = w2.astype(jnp.bfloat16).astype(jnp.float32)
    h_ref = jnp.maximum(xb @ w1b + b1[None, :], 0.0)
    logits_ref = h_ref.astype(jnp.bfloat16).astype(jnp.float32) @ w2b + b2[None, :]
    ref_bf16 = jax.nn.softmax(logits_ref, axis=1)
    assert jnp.allclose(out, ref_bf16, atol=1e-2), float(jnp.max(jnp.abs(out - ref_bf16)))

    # Full-f32 module semantics, looser tolerance for bf16 quantization.
    h32 = jnp.maximum(x @ w1 + b1[None, :], 0.0)
    ref_f32 = jax.nn.softmax(h32 @ w2 + b2[None, :], axis=1)
    assert jnp.allclose(out, ref_f32, atol=3e-2), float(jnp.max(jnp.abs(out - ref_f32)))

    # Softmax rows sum to ~1 (padded label columns contribute exactly 0; bf16 output
    # + approx reciprocal give ~1e-3-level deviation).
    assert jnp.allclose(jnp.sum(out, axis=1), 1.0, atol=1e-2)

    print("KERNEL_OK")
</pallas_src>

<mosaic_0001>
module attributes {stable_mosaic.version = 11 : i64} {
  func.func @mlp_kernel(%arg0: i32, %arg1: memref<200x32xf32, #tpu.memory_space<vmem>>, %arg2: memref<32x128xbf16, #tpu.memory_space<vmem>>, %arg3: memref<1x128xf32, #tpu.memory_space<vmem>>, %arg4: memref<128x128xbf16, #tpu.memory_space<vmem>>, %arg5: memref<1x128xf32, #tpu.memory_space<vmem>>, %arg6: memref<200x128xbf16, #tpu.memory_space<vmem>>) attributes {dimension_semantics = [#tpu.dimension_semantics<parallel>], iteration_bounds = array<i64: 1>, scalar_prefetch = 0 : i64, scratch_operands = 0 : i64, tpu.core_type = #tpu.core_type<tc>, window_params = [{transform_indices = @transform_0, window_bounds = array<i64: 200, 32>}, {pipeline_mode = #tpu.pipeline_mode<synchronous>, transform_indices = @transform_1, window_bounds = array<i64: 32, 128>}, {pipeline_mode = #tpu.pipeline_mode<synchronous>, transform_indices = @transform_2, window_bounds = array<i64: 1, 128>}, {pipeline_mode = #tpu.pipeline_mode<synchronous>, transform_indices = @transform_3, window_bounds = array<i64: 128, 128>}, {pipeline_mode = #tpu.pipeline_mode<synchronous>, transform_indices = @transform_4, window_bounds = array<i64: 1, 128>}, {transform_indices = @transform_5, window_bounds = array<i64: 200, 128>}]} {
    %c0 = arith.constant 0 : index
    %c0_0 = arith.constant 0 : index
    %0 = vector.load %arg1[%c0, %c0_0] : memref<200x32xf32, #tpu.memory_space<vmem>>, vector<200x32xf32>
    %1 = arith.truncf %0 : vector<200x32xf32> to vector<200x32xbf16>
    %c0_1 = arith.constant 0 : index
    %c0_2 = arith.constant 0 : index
    %2 = vector.load %arg2[%c0_1, %c0_2] : memref<32x128xbf16, #tpu.memory_space<vmem>>, vector<32x128xbf16>
    %cst = arith.constant dense<0.000000e+00> : vector<200x128xf32>
    %3 = tpu.matmul %1, %2, %cst {dimension_numbers = #tpu.dot_dimension_numbers<[1], [0], [0], [1], [0, 0, 1, 1], [], []>} : vector<200x32xbf16>, vector<32x128xbf16>, vector<200x128xf32> -> vector<200x128xf32>
    %c0_3 = arith.constant 0 : index
    %c0_4 = arith.constant 0 : index
    %4 = vector.load %arg3[%c0_3, %c0_4] : memref<1x128xf32, #tpu.memory_space<vmem>>, vector<1x128xf32>
    %5 = vector.broadcast %4 : vector<1x128xf32> to vector<200x128xf32>
    %6 = arith.addf %3, %5 : vector<200x128xf32>
    %cst_5 = arith.constant 0.000000e+00 : f32
    %7 = vector.broadcast %cst_5 : f32 to vector<200x128xf32>
    %8 = arith.maximumf %6, %7 : vector<200x128xf32>
    %9 = arith.truncf %8 : vector<200x128xf32> to vector<200x128xbf16>
    %c0_6 = arith.constant 0 : index
    %c0_7 = arith.constant 0 : index
    %10 = vector.load %arg4[%c0_6, %c0_7] : memref<128x128xbf16, #tpu.memory_space<vmem>>, vector<128x128xbf16>
    %cst_8 = arith.constant dense<0.000000e+00> : vector<200x128xf32>
    %11 = tpu.matmul %9, %10, %cst_8 {dimension_numbers = #tpu.dot_dimension_numbers<[1], [0], [0], [1], [0, 0, 1, 1], [], []>} : vector<200x128xbf16>, vector<128x128xbf16>, vector<200x128xf32> -> vector<200x128xf32>
    %c0_9 = arith.constant 0 : index
    %c0_10 = arith.constant 0 : index
    %12 = vector.load %arg5[%c0_9, %c0_10] : memref<1x128xf32, #tpu.memory_space<vmem>>, vector<1x128xf32>
    %13 = vector.broadcast %12 : vector<1x128xf32> to vector<200x128xf32>
    %14 = arith.addf %11, %13 : vector<200x128xf32>
    %cst_11 = arith.constant dense<0xFF800000> : vector<200xf32>
    %15 = vector.multi_reduction <maximumf>, %14, %cst_11 [1] : vector<200x128xf32> to vector<200xf32>
    %16 = vector.shape_cast %15 : vector<200xf32> to vector<200x1xf32>
    %17 = vector.broadcast %16 : vector<200x1xf32> to vector<200x128xf32>
    %18 = arith.subf %14, %17 : vector<200x128xf32>
    %19 = math.exp %18 : vector<200x128xf32>
    %cst_12 = arith.constant dense<0.000000e+00> : vector<200xf32>
    %20 = vector.multi_reduction <add>, %19, %cst_12 [1] : vector<200x128xf32> to vector<200xf32>
    %21 = vector.shape_cast %20 : vector<200xf32> to vector<200x1xf32>
    %22 = tpu.reciprocal %21 {approx = true} : vector<200x1xf32> -> vector<200x1xf32>
    %23 = vector.broadcast %22 : vector<200x1xf32> to vector<200x128xf32>
    %24 = arith.mulf %19, %23 : vector<200x128xf32>
    %25 = arith.truncf %24 : vector<200x128xf32> to vector<200x128xbf16>
    %c0_13 = arith.constant 0 : index
    %c0_14 = arith.constant 0 : index
    %26 = vector.load %arg6[%c0_13, %c0_14] : memref<200x128xbf16, #tpu.memory_space<vmem>>, vector<200x128xbf16>
    tpu.vector_store %arg6[%c0_13, %c0_14], %25 {strides = array<i32>} : memref<200x128xbf16, #tpu.memory_space<vmem>>, vector<200x128xbf16>,
    return
  }
  func.func @transform_0(%arg0: i32) -> (i32, i32) {
    %c0_i32 = arith.constant 0 : i32
    %c0_i32_0 = arith.constant 0 : i32
    return %arg0, %c0_i32 : i32, i32
  }
  func.func @transform_1(%arg0: i32) -> (i32, i32) {
    %c0_i32 = arith.constant 0 : i32
    %c0_i32_0 = arith.constant 0 : i32
    %c0_i32_1 = arith.constant 0 : i32
    return %c0_i32, %c0_i32_0 : i32, i32
  }
  func.func @transform_2(%arg0: i32) -> (i32, i32) {
    %c0_i32 = arith.constant 0 : i32
    %c0_i32_0 = arith.constant 0 : i32
    %c0_i32_1 = arith.constant 0 : i32
    return %c0_i32, %c0_i32_0 : i32, i32
  }
  func.func @transform_3(%arg0: i32) -> (i32, i32) {
    %c0_i32 = arith.constant 0 : i32
    %c0_i32_0 = arith.constant 0 : i32
    %c0_i32_1 = arith.constant 0 : i32
    return %c0_i32, %c0_i32_0 : i32, i32
  }
  func.func @transform_4(%arg0: i32) -> (i32, i32) {
    %c0_i32 = arith.constant 0 : i32
    %c0_i32_0 = arith.constant 0 : i32
    %c0_i32_1 = arith.constant 0 : i32
    return %c0_i32, %c0_i32_0 : i32, i32
  }
  func.func @transform_5(%arg0: i32) -> (i32, i32) {
    %c0_i32 = arith.constant 0 : i32
    %c0_i32_0 = arith.constant 0 : i32
    return %arg0, %c0_i32 : i32, i32
  }
}

</mosaic_0001>

<llo_original>
// kernel: mlp_forward.1
$region0: #{mlp_forward.1}
  #allocation0 [shape = 'u32[]', space=smem, size = 0x4, offset = 0x4, fixed_abs, tag = 'smem constant byte address 0x4 - core index']
  #allocation1 [shape = 'u32[144,128]{1,0:T(1,128)}', space=vmem, size = 0x12000, scoped, tag = 'internal scratch']
  %s0 = inlined_call_operand.vmem [shape: f32[200,32], index: 0, kind: input, shape index: {}]
  %s1 = inlined_call_operand.vmem [shape: bf16[32,128], index: 1, kind: input, shape index: {}]
  %s2 = inlined_call_operand.vmem [shape: f32[1,128], index: 2, kind: input, shape index: {}]
  %s3 = inlined_call_operand.vmem [shape: bf16[128,128], index: 3, kind: input, shape index: {}]
  %s4 = inlined_call_operand.vmem [shape: f32[1,128], index: 4, kind: input, shape index: {}]
  %s5 = inlined_call_operand.vmem [shape: bf16[200,128], index: 5, kind: output, shape index: {}]
  %s6 = sld [smem:[#allocation0]]
  $region30: #{mlp_forward.1} parent=0
    _
  %s8 = ssub.s32 1, %s6
  %s9 = scalar_select 0, %s8, %s6
  // Predicated region
  $region2: #{mlp_forward.1} parent=0 // pred_check
    _
  $region3: #{mlp_forward.1} parent=0 // pred_check_branch
    %11 = sbr.rel (0) target = $region5
  $region4: #{mlp_forward.1} parent=0 // pred_region
    _
  $region5: #{mlp_forward.1} parent=0 // pred_fallthru
    _
  // Predicated region
  $region6: #{mlp_forward.1} parent=0 // pred_check
    _
  $region7: #{mlp_forward.1} parent=0 // pred_check_branch
    %13 = sbr.rel (0) target = $region9
  $region8: #{mlp_forward.1} parent=0 // pred_region
    _
  $region9: #{mlp_forward.1} parent=0 // pred_fallthru
    _
  // Predicated region
  $region10: #{mlp_forward.1} parent=0 // pred_check
    _
  $region11: #{mlp_forward.1} parent=0 // pred_check_branch
    %15 = sbr.rel (0) target = $region13
  $region12: #{mlp_forward.1} parent=0 // pred_region
    _
  $region13: #{mlp_forward.1} parent=0 // pred_fallthru
    _
  // Predicated region
  $region14: #{mlp_forward.1} parent=0 // pred_check
    _
  $region15: #{mlp_forward.1} parent=0 // pred_check_branch
    %17 = sbr.rel (0) target = $region17
  $region16: #{mlp_forward.1} parent=0 // pred_region
    _
  $region17: #{mlp_forward.1} parent=0 // pred_fallthru
    _
  // Predicated region
  $region18: #{mlp_forward.1} parent=0 // pred_check
    _
  $region19: #{mlp_forward.1} parent=0 // pred_check_branch
    %19 = sbr.rel (0) target = $region21
  $region20: #{mlp_forward.1} parent=0 // pred_region
    _
  $region21: #{mlp_forward.1} parent=0 // pred_fallthru
    _
  %v21 = vld [vmem:[%s0] sm:$0xff]
  %v22 = vld [vmem:[%s0 + $0x8] sm:$0xff]
  %v23 = vld [vmem:[%s0 + $0x10] sm:$0xff]
  %v24 = vld [vmem:[%s0 + $0x18] sm:$0xff]
  %v25 = vld [vmem:[%s0 + $0x20] sm:$0xff]
  %v26 = vld [vmem:[%s0 + $0x28] sm:$0xff]
  %v27 = vld [vmem:[%s0 + $0x30] sm:$0xff]
  %v28 = vld [vmem:[%s0 + $0x38] sm:$0xff]
  %v29 = vld [vmem:[%s0 + $0x40] sm:$0xff]
  %v30 = vld [vmem:[%s0 + $0x48] sm:$0xff]
  %v31 = vld [vmem:[%s0 + $0x50] sm:$0xff]
  %v32 = vld [vmem:[%s0 + $0x58] sm:$0xff]
  %v33 = vld [vmem:[%s0 + $0x60] sm:$0xff]
  %v34 = vld [vmem:[%s0 + $0x68] sm:$0xff]
  %v35 = vld [vmem:[%s0 + $0x70] sm:$0xff]
  %v36 = vld [vmem:[%s0 + $0x78] sm:$0xff]
  %v37 = vld [vmem:[%s0 + $0x80] sm:$0xff]
  %v38 = vld [vmem:[%s0 + $0x88] sm:$0xff]
  %v39 = vld [vmem:[%s0 + $0x90] sm:$0xff]
  %v40 = vld [vmem:[%s0 + $0x98] sm:$0xff]
  %v41 = vld [vmem:[%s0 + $0xa0] sm:$0xff]
  %v42 = vld [vmem:[%s0 + $0xa8] sm:$0xff]
  %v43 = vld [vmem:[%s0 + $0xb0] sm:$0xff]
  %v44 = vld [vmem:[%s0 + $0xb8] sm:$0xff]
  %v45 = vld [vmem:[%s0 + $0xc0] sm:$0xff]
  %v46 = vpack.c.bf16 %v22, %v21
  %v47 = vpack.c.bf16 %v24, %v23
  %v48 = vpack.c.bf16 %v26, %v25
  %v49 = vpack.c.bf16 %v28, %v27
  %v50 = vpack.c.bf16 %v30, %v29
  %v51 = vpack.c.bf16 %v32, %v31
  %v52 = vpack.c.bf16 %v34, %v33
  %v53 = vpack.c.bf16 %v36, %v35
  %v54 = vpack.c.bf16 %v38, %v37
  %v55 = vpack.c.bf16 %v40, %v39
  %v56 = vpack.c.bf16 %v42, %v41
  %v57 = vpack.c.bf16 %v44, %v43
  %v58 = vpack.c.bf16 %v45, %v45
  %v59 = vld [vmem:[%s1] sm:$0xf]
  %v60 = vld [vmem:[%s1 + $0x4] sm:$0xf]
  %v61 = vld [vmem:[%s1 + $0x8] sm:$0xf]
  %v62 = vld [vmem:[%s1 + $0xc] sm:$0xf]
  %v63 = vld [vmem:[%s2] sm:$0x1]
  %v65 = vlaneseq
  %v66 = vshrl.u32 %v65, 7
  %v67 = vsub.s32 0, %v66
  %v68 = vrot.slane %v63, %v67
  %v74 = vunpack.c.l.b16 %v59
  %v75 = vunpack.c.l.b16 %v60
  %v76 = vunpack.c.l.b16 %v61
  %v77 = vunpack.c.l.b16 %v62
  %v78 = vpack.c.b16 %v75, %v74
  %v79 = vpack.c.b16 %v77, %v76
  %vm82 = vcmask 261120
  %v84 = vsel %vm82, %v46, 0
  %v87 = vsel %vm82, %v47, 0
  %v90 = vsel %vm82, %v48, 0
  %v93 = vsel %vm82, %v49, 0
  %v96 = vsel %vm82, %v50, 0
  %v99 = vsel %vm82, %v51, 0
  %v102 = vsel %vm82, %v52, 0
  %v105 = vsel %vm82, %v53, 0
  %v108 = vsel %vm82, %v54, 0
  %v111 = vsel %vm82, %v55, 0
  %v114 = vsel %vm82, %v56, 0
  %v117 = vsel %vm82, %v57, 0
  %v120 = vsel %vm82, %v58, 0
  %122 = vmatprep.subr.bf16.mxu0 0
  %123 = vmatpush1.bf16.msra.mxu0 %v78
  %124 = vmatprep.subr.bf16.mxu0 0
  %125 = vmatpush1.bf16.msra.mxu0 %v79
  %126 = vmatprep.subr.bf16.mxu0 0
  %127 = vmatpush1.bf16.msra.mxu0 0
  %128 = vmatprep.subr.bf16.mxu0 0
  %129 = vmatpush1.bf16.msra.mxu0 0
  %130 = vmatprep.subr.bf16.mxu0 0
  %131 = vmatpush1.bf16.msra.mxu0 0
  %132 = vmatprep.subr.bf16.mxu0 0
  %133 = vmatpush1.bf16.msra.mxu0 0
  %134 = vmatprep.subr.bf16.mxu0 0
  %135 = vmatpush1.bf16.msra.mxu0 0
  %136 = vmatprep.subr.bf16.mxu0 0
  %137 = vmatpush1.bf16.msra.mxu0 0
  %138 = vmatprep.subr.bf16.mxu0 0
  %139 = vmatpush1.bf16.msra.mxu0 0
  %140 = vmatprep.subr.bf16.mxu0 0
  %141 = vmatpush1.bf16.msra.mxu0 0
  %142 = vmatprep.subr.bf16.mxu0 0
  %143 = vmatpush1.bf16.msra.mxu0 0
  %144 = vmatprep.subr.bf16.mxu0 0
  %145 = vmatpush1.bf16.msra.mxu0 0
  %146 = vmatprep.subr.bf16.mxu0 0
  %147 = vmatpush1.bf16.msra.mxu0 0
  %148 = vmatprep.subr.bf16.mxu0 0
  %149 = vmatpush1.bf16.msra.mxu0 0
  %150 = vmatprep.subr.bf16.mxu0 0
  %151 = vmatpush1.bf16.msra.mxu0 0
  %152 = vmatprep.subr.bf16.mxu0 0
  %153 = vmatpush1.bf16.msra.mxu0 0
  %154 = vmatprep.mubr.bf16.mxu0 0
  %155 = vmatmul.mubr.bf16.gmra.mrb[0].mxu0 %v84
  %v156 = vpop.f32.mrb[0].mxu0
  %v157 = vadd.f32 %v68, %v156
  %v158 = vpop.f32.mrb[0].mxu0
  %v159 = vpop.f32.mrb[0].mxu0
  %v160 = vadd.f32 %v68, %v159
  %v161 = vpop.f32.mrb[0].mxu0
  %162 = vmatprep.mubr.bf16.mxu0 0
  %163 = vmatmul.mubr.bf16.gmra.mrb[0].mxu0 %v87
  %v164 = vpop.f32.mrb[0].mxu0
  %v165 = vadd.f32 %v68, %v164
  %v166 = vpop.f32.mrb[0].mxu0
  %v167 = vpop.f32.mrb[0].mxu0
  %v168 = vadd.f32 %v68, %v167
  %v169 = vpop.f32.mrb[0].mxu0
  %170 = vmatprep.mubr.bf16.mxu0 0
  %171 = vmatmul.mubr.bf16.gmra.mrb[0].mxu0 %v90
  %v172 = vpop.f32.mrb[0].mxu0
  %v173 = vadd.f32 %v68, %v172
  %v174 = vpop.f32.mrb[0].mxu0
  %v175 = vpop.f32.mrb[0].mxu0
  %v176 = vadd.f32 %v68, %v175
  %v177 = vpop.f32.mrb[0].mxu0
  %178 = vmatprep.mubr.bf16.mxu0 0
  %179 = vmatmul.mubr.bf16.gmra.mrb[0].mxu0 %v93
  %v180 = vpop.f32.mrb[0].mxu0
  %v181 = vadd.f32 %v68, %v180
  %v182 = vpop.f32.mrb[0].mxu0
  %v183 = vpop.f32.mrb[0].mxu0
  %v184 = vadd.f32 %v68, %v183
  %v185 = vpop.f32.mrb[0].mxu0
  %186 = vmatprep.mubr.bf16.mxu0 0
  %187 = vmatmul.mubr.bf16.gmra.mrb[0].mxu0 %v96
  %v188 = vpop.f32.mrb[0].mxu0
  %v189 = vadd.f32 %v68, %v188
  %v190 = vpop.f32.mrb[0].mxu0
  %v191 = vpop.f32.mrb[0].mxu0
  %v192 = vadd.f32 %v68, %v191
  %v193 = vpop.f32.mrb[0].mxu0
  %194 = vmatprep.mubr.bf16.mxu0 0
  %195 = vmatmul.mubr.bf16.gmra.mrb[0].mxu0 %v99
  %v196 = vpop.f32.mrb[0].mxu0
  %v197 = vadd.f32 %v68, %v196
  %v198 = vpop.f32.mrb[0].mxu0
  %v199 = vpop.f32.mrb[0].mxu0
  %v200 = vadd.f32 %v68, %v199
  %v201 = vpop.f32.mrb[0].mxu0
  %202 = vmatprep.mubr.bf16.mxu0 0
  %203 = vmatmul.mubr.bf16.gmra.mrb[0].mxu0 %v102
  %v204 = vpop.f32.mrb[0].mxu0
  %v205 = vadd.f32 %v68, %v204
  %v206 = vpop.f32.mrb[0].mxu0
  %v207 = vpop.f32.mrb[0].mxu0
  %v208 = vadd.f32 %v68, %v207
  %v209 = vpop.f32.mrb[0].mxu0
  %210 = vmatprep.mubr.bf16.mxu0 0
  %211 = vmatmul.mubr.bf16.gmra.mrb[0].mxu0 %v105
  %v212 = vpop.f32.mrb[0].mxu0
  %v213 = vadd.f32 %v68, %v212
  %v214 = vpop.f32.mrb[0].mxu0
  %v215 = vpop.f32.mrb[0].mxu0
  %v216 = vadd.f32 %v68, %v215
  %v217 = vpop.f32.mrb[0].mxu0
  %218 = vmatprep.mubr.bf16.mxu0 0
  %219 = vmatmul.mubr.bf16.gmra.mrb[0].mxu0 %v108
  %v220 = vpop.f32.mrb[0].mxu0
  %v221 = vadd.f32 %v68, %v220
  %v222 = vpop.f32.mrb[0].mxu0
  %v223 = vpop.f32.mrb[0].mxu0
  %v224 = vadd.f32 %v68, %v223
  %v225 = vpop.f32.mrb[0].mxu0
  %226 = vmatprep.mubr.bf16.mxu0 0
  %227 = vmatmul.mubr.bf16.gmra.mrb[0].mxu0 %v111
  %v228 = vpop.f32.mrb[0].mxu0
  %v229 = vadd.f32 %v68, %v228
  %v230 = vpop.f32.mrb[0].mxu0
  %v231 = vpop.f32.mrb[0].mxu0
  %v232 = vadd.f32 %v68, %v231
  %v233 = vpop.f32.mrb[0].mxu0
  %234 = vmatprep.mubr.bf16.mxu0 0
  %235 = vmatmul.mubr.bf16.gmra.mrb[0].mxu0 %v114
  %v236 = vpop.f32.mrb[0].mxu0
  %v237 = vadd.f32 %v68, %v236
  %v238 = vpop.f32.mrb[0].mxu0
  %v239 = vpop.f32.mrb[0].mxu0
  %v240 = vadd.f32 %v68, %v239
  %v241 = vpop.f32.mrb[0].mxu0
  %242 = vmatprep.mubr.bf16.mxu0 0
  %243 = vmatmul.mubr.bf16.gmra.mrb[0].mxu0 %v117
  %v244 = vpop.f32.mrb[0].mxu0
  %v245 = vadd.f32 %v68, %v244
  %v246 = vpop.f32.mrb[0].mxu0
  %v247 = vpop.f32.mrb[0].mxu0
  %v248 = vadd.f32 %v68, %v247
  %v249 = vpop.f32.mrb[0].mxu0
  %250 = vmatprep.mubr.bf16.mxu0 0
  %251 = vmatmul.mubr.bf16.gmra.mrb[0].mxu0 %v120
  %v252 = vpop.f32.mrb[0].mxu0
  %v253 = vadd.f32 %v68, %v252
  %v254 = vpop.f32.mrb[0].mxu0
  %v255 = vpop.f32.mrb[0].mxu0
  %v256 = vpop.f32.mrb[0].mxu0
  %257 = vdwg.mxu0
  %v258 = vmax.f32 %v157, 0.0
  %v259 = vmax.f32 %v160, 0.0
  %v260 = vmax.f32 %v165, 0.0
  %v261 = vmax.f32 %v168, 0.0
  %v262 = vmax.f32 %v173, 0.0
  %v263 = vmax.f32 %v176, 0.0
  %v264 = vmax.f32 %v181, 0.0
  %v265 = vmax.f32 %v184, 0.0
  %v266 = vmax.f32 %v189, 0.0
  %v267 = vmax.f32 %v192, 0.0
  %v268 = vmax.f32 %v197, 0.0
  %v269 = vmax.f32 %v200, 0.0
  %v270 = vmax.f32 %v205, 0.0
  %v271 = vmax.f32 %v208, 0.0
  %v272 = vmax.f32 %v213, 0.0
  %v273 = vmax.f32 %v216, 0.0
  %v274 = vmax.f32 %v221, 0.0
  %v275 = vmax.f32 %v224, 0.0
  %v276 = vmax.f32 %v229, 0.0
  %v277 = vmax.f32 %v232, 0.0
  %v278 = vmax.f32 %v237, 0.0
  %v279 = vmax.f32 %v240, 0.0
  %v280 = vmax.f32 %v245, 0.0
  %v281 = vmax.f32 %v248, 0.0
  %v282 = vmax.f32 %v253, 0.0
  %v283 = vpack.c.bf16 %v259, %v258
  %v284 = vpack.c.bf16 %v261, %v260
  %v285 = vpack.c.bf16 %v263, %v262
  %v286 = vpack.c.bf16 %v265, %v264
  %v287 = vpack.c.bf16 %v267, %v266
  %v288 = vpack.c.bf16 %v269, %v268
  %v289 = vpack.c.bf16 %v271, %v270
  %v290 = vpack.c.bf16 %v273, %v272
  %v291 = vpack.c.bf16 %v275, %v274
  %v292 = vpack.c.bf16 %v277, %v276
  %v293 = vpack.c.bf16 %v279, %v278
  %v294 = vpack.c.bf16 %v281, %v280
  %v295 = vpack.c.bf16 %v282, %v282
  %v296 = vld [vmem:[%s3] sm:$0xf]
  %v297 = vld [vmem:[%s3 + $0x4] sm:$0xf]
  %v298 = vld [vmem:[%s3 + $0x8] sm:$0xf]
  %v299 = vld [vmem:[%s3 + $0xc] sm:$0xf]
  %v300 = vld [vmem:[%s3 + $0x10] sm:$0xf]
  %v301 = vld [vmem:[%s3 + $0x14] sm:$0xf]
  %v302 = vld [vmem:[%s3 + $0x18] sm:$0xf]
  %v303 = vld [vmem:[%s3 + $0x1c] sm:$0xf]
  %v304 = vld [vmem:[%s3 + $0x20] sm:$0xf]
  %v305 = vld [vmem:[%s3 + $0x24] sm:$0xf]
  %v306 = vld [vmem:[%s3 + $0x28] sm:$0xf]
  %v307 = vld [vmem:[%s3 + $0x2c] sm:$0xf]
  %v308 = vld [vmem:[%s3 + $0x30] sm:$0xf]
  %v309 = vld [vmem:[%s3 + $0x34] sm:$0xf]
  %v310 = vld [vmem:[%s3 + $0x38] sm:$0xf]
  %v311 = vld [vmem:[%s3 + $0x3c] sm:$0xf]
  %v312 = vld [vmem:[%s4] sm:$0x1]
  %v314 = vlaneseq
  %v315 = vshrl.u32 %v314, 7
  %v316 = vsub.s32 0, %v315
  %v317 = vrot.slane %v312, %v316
  %v335 = vunpack.c.l.b16 %v296
  %v336 = vunpack.c.l.b16 %v297
  %v337 = vunpack.c.l.b16 %v298
  %v338 = vunpack.c.l.b16 %v299
  %v339 = vunpack.c.l.b16 %v300
  %v340 = vunpack.c.l.b16 %v301
  %v341 = vunpack.c.l.b16 %v302
  %v342 = vunpack.c.l.b16 %v303
  %v343 = vunpack.c.l.b16 %v304
  %v344 = vunpack.c.l.b16 %v305
  %v345 = vunpack.c.l.b16 %v306
  %v346 = vunpack.c.l.b16 %v307
  %v347 = vunpack.c.l.b16 %v308
  %v348 = vunpack.c.l.b16 %v309
  %v349 = vunpack.c.l.b16 %v310
  %v350 = vunpack.c.l.b16 %v311
  %v351 = vpack.c.b16 %v336, %v335
  %v352 = vpack.c.b16 %v338, %v337
  %v353 = vpack.c.b16 %v340, %v339
  %v354 = vpack.c.b16 %v342, %v341
  %v355 = vpack.c.b16 %v344, %v343
  %v356 = vpack.c.b16 %v346, %v345
  %v357 = vpack.c.b16 %v348, %v347
  %v358 = vpack.c.b16 %v350, %v349
  %367 = vmatprep.subr.bf16.mxu0 0
  %368 = vmatpush1.bf16.msra.mxu0 %v351
  %369 = vmatprep.subr.bf16.mxu0 0
  %370 = vmatpush1.bf16.msra.mxu0 %v352
  %371 = vmatprep.subr.bf16.mxu0 0
  %372 = vmatpush1.bf16.msra.mxu0 %v353
  %373 = vmatprep.subr.bf16.mxu0 0
  %374 = vmatpush1.bf16.msra.mxu0 %v354
  %375 = vmatprep.subr.bf16.mxu0 0
  %376 = vmatpush1.bf16.msra.mxu0 %v355
  %377 = vmatprep.subr.bf16.mxu0 0
  %378 = vmatpush1.bf16.msra.mxu0 %v356
  %379 = vmatprep.subr.bf16.mxu0 0
  %380 = vmatpush1.bf16.msra.mxu0 %v357
  %381 = vmatprep.subr.bf16.mxu0 0
  %382 = vmatpush1.bf16.msra.mxu0 %v358
  %383 = vmatprep.subr.bf16.mxu0 0
  %384 = vmatpush1.bf16.msra.mxu0 0
  %385 = vmatprep.subr.bf16.mxu0 0
  %386 = vmatpush1.bf16.msra.mxu0 0
  %387 = vmatprep.subr.bf16.mxu0 0
  %388 = vmatpush1.bf16.msra.mxu0 0
  %389 = vmatprep.subr.bf16.mxu0 0
  %390 = vmatpush1.bf16.msra.mxu0 0
  %391 = vmatprep.subr.bf16.mxu0 0
  %392 = vmatpush1.bf16.msra.mxu0 0
  %393 = vmatprep.subr.bf16.mxu0 0
  %394 = vmatpush1.bf16.msra.mxu0 0
  %395 = vmatprep.subr.bf16.mxu0 0
  %396 = vmatpush1.bf16.msra.mxu0 0
  %397 = vmatprep.subr.bf16.mxu0 0
  %398 = vmatpush1.bf16.msra.mxu0 0
  %399 = vmatprep.mubr.bf16.mxu0 0
  %400 = vmatmul.mubr.bf16.gmra.mrb[0].mxu0 %v283
  %v401 = vpop.f32.mrb[0].mxu0
  %v402 = vadd.f32 %v317, %v401
  %v403 = vpop.f32.mrb[0].mxu0
  %v404 = vpop.f32.mrb[0].mxu0
  %v405 = vadd.f32 %v317, %v404
  %v406 = vpop.f32.mrb[0].mxu0
  %407 = vmatprep.mubr.bf16.mxu0 0
  %408 = vmatmul.mubr.bf16.gmra.mrb[0].mxu0 %v284
  %v409 = vpop.f32.mrb[0].mxu0
  %v410 = vadd.f32 %v317, %v409
  %v411 = vpop.f32.mrb[0].mxu0
  %v412 = vpop.f32.mrb[0].mxu0
  %v413 = vadd.f32 %v317, %v412
  %v414 = vpop.f32.mrb[0].mxu0
  %415 = vmatprep.mubr.bf16.mxu0 0
  %416 = vmatmul.mubr.bf16.gmra.mrb[0].mxu0 %v285
  %v417 = vpop.f32.mrb[0].mxu0
  %v418 = vadd.f32 %v317, %v417
  %v419 = vpop.f32.mrb[0].mxu0
  %v420 = vpop.f32.mrb[0].mxu0
  %v421 = vadd.f32 %v317, %v420
  %v422 = vpop.f32.mrb[0].mxu0
  %423 = vmatprep.mubr.bf16.mxu0 0
  %424 = vmatmul.mubr.bf16.gmra.mrb[0].mxu0 %v286
  %v425 = vpop.f32.mrb[0].mxu0
  %v426 = vadd.f32 %v317, %v425
  %v427 = vpop.f32.mrb[0].mxu0
  %v428 = vpop.f32.mrb[0].mxu0
  %v429 = vadd.f32 %v317, %v428
  %v430 = vpop.f32.mrb[0].mxu0
  %431 = vmatprep.mubr.bf16.mxu0 0
  %432 = vmatmul.mubr.bf16.gmra.mrb[0].mxu0 %v287
  %v433 = vpop.f32.mrb[0].mxu0
  %v434 = vadd.f32 %v317, %v433
  %v435 = vpop.f32.mrb[0].mxu0
  %v436 = vpop.f32.mrb[0].mxu0
  %v437 = vadd.f32 %v317, %v436
  %v438 = vpop.f32.mrb[0].mxu0
  %439 = vmatprep.mubr.bf16.mxu0 0
  %440 = vmatmul.mubr.bf16.gmra.mrb[0].mxu0 %v288
  %v441 = vpop.f32.mrb[0].mxu0
  %v442 = vadd.f32 %v317, %v441
  %v443 = vpop.f32.mrb[0].mxu0
  %v444 = vpop.f32.mrb[0].mxu0
  %v445 = vadd.f32 %v317, %v444
  %v446 = vpop.f32.mrb[0].mxu0
  %447 = vmatprep.mubr.bf16.mxu0 0
  %448 = vmatmul.mubr.bf16.gmra.mrb[0].mxu0 %v289
  %v449 = vpop.f32.mrb[0].mxu0
  %v450 = vadd.f32 %v317, %v449
  %v451 = vpop.f32.mrb[0].mxu0
  %v452 = vpop.f32.mrb[0].mxu0
  %v453 = vadd.f32 %v317, %v452
  %v454 = vpop.f32.mrb[0].mxu0
  %455 = vmatprep.mubr.bf16.mxu0 0
  %456 = vmatmul.mubr.bf16.gmra.mrb[0].mxu0 %v290
  %v457 = vpop.f32.mrb[0].mxu0
  %v458 = vadd.f32 %v317, %v457
  %v459 = vpop.f32.mrb[0].mxu0
  %v460 = vpop.f32.mrb[0].mxu0
  %v461 = vadd.f32 %v317, %v460
  %v462 = vpop.f32.mrb[0].mxu0
  %463 = vmatprep.mubr.bf16.mxu0 0
  %464 = vmatmul.mubr.bf16.gmra.mrb[0].mxu0 %v291
  %v465 = vpop.f32.mrb[0].mxu0
  %v466 = vadd.f32 %v317, %v465
  %v467 = vpop.f32.mrb[0].mxu0
  %v468 = vpop.f32.mrb[0].mxu0
  %v469 = vadd.f32 %v317, %v468
  %v470 = vpop.f32.mrb[0].mxu0
  %471 = vmatprep.mubr.bf16.mxu0 0
  %472 = vmatmul.mubr.bf16.gmra.mrb[0].mxu0 %v292
  %v473 = vpop.f32.mrb[0].mxu0
  %v474 = vadd.f32 %v317, %v473
  %v475 = vpop.f32.mrb[0].mxu0
  %v476 = vpop.f32.mrb[0].mxu0
  %v477 = vadd.f32 %v317, %v476
  %v478 = vpop.f32.mrb[0].mxu0
  %479 = vmatprep.mubr.bf16.mxu0 0
  %480 = vmatmul.mubr.bf16.gmra.mrb[0].mxu0 %v293
  %v481 = vpop.f32.mrb[0].mxu0
  %v482 = vadd.f32 %v317, %v481
  %v483 = vpop.f32.mrb[0].mxu0
  %v484 = vpop.f32.mrb[0].mxu0
  %v485 = vadd.f32 %v317, %v484
  %v486 = vpop.f32.mrb[0].mxu0
  %487 = vmatprep.mubr.bf16.mxu0 0
  %488 = vmatmul.mubr.bf16.gmra.mrb[0].mxu0 %v294
  %v489 = vpop.f32.mrb[0].mxu0
  %v490 = vadd.f32 %v317, %v489
  %v491 = vpop.f32.mrb[0].mxu0
  %v492 = vpop.f32.mrb[0].mxu0
  %v493 = vadd.f32 %v317, %v492
  %v494 = vpop.f32.mrb[0].mxu0
  %495 = vmatprep.mubr.bf16.mxu0 0
  %496 = vmatmul.mubr.bf16.gmra.mrb[0].mxu0 %v295
  %v497 = vpop.f32.mrb[0].mxu0
  %v498 = vadd.f32 %v317, %v497
  %v499 = vpop.f32.mrb[0].mxu0
  %v500 = vpop.f32.mrb[0].mxu0
  %v501 = vpop.f32.mrb[0].mxu0
  %502 = vdwg.mxu0
  %503 = vmax.xlane.f32.xlu0 %v402
  %v504 = vpop.xlane.xlu0 %503
  %505 = vmax.xlane.f32.xlu0 %v405
  %v506 = vpop.xlane.xlu0 %505
  %507 = vmax.xlane.f32.xlu0 %v410
  %v508 = vpop.xlane.xlu0 %507
  %509 = vmax.xlane.f32.xlu0 %v413
  %v510 = vpop.xlane.xlu0 %509
  %511 = vmax.xlane.f32.xlu0 %v418
  %v512 = vpop.xlane.xlu0 %511
  %513 = vmax.xlane.f32.xlu0 %v421
  %v514 = vpop.xlane.xlu0 %513
  %515 = vmax.xlane.f32.xlu0 %v426
  %v516 = vpop.xlane.xlu0 %515
  %517 = vmax.xlane.f32.xlu0 %v429
  %v518 = vpop.xlane.xlu0 %517
  %519 = vmax.xlane.f32.xlu0 %v434
  %v520 = vpop.xlane.xlu0 %519
  %521 = vmax.xlane.f32.xlu0 %v437
  %v522 = vpop.xlane.xlu0 %521
  %523 = vmax.xlane.f32.xlu0 %v442
  %v524 = vpop.xlane.xlu0 %523
  %525 = vmax.xlane.f32.xlu0 %v445
  %v526 = vpop.xlane.xlu0 %525
  %527 = vmax.xlane.f32.xlu0 %v450
  %v528 = vpop.xlane.xlu0 %527
  %529 = vmax.xlane.f32.xlu0 %v453
  %v530 = vpop.xlane.xlu0 %529
  %531 = vmax.xlane.f32.xlu0 %v458
  %v532 = vpop.xlane.xlu0 %531
  %533 = vmax.xlane.f32.xlu0 %v461
  %v534 = vpop.xlane.xlu0 %533
  %535 = vmax.xlane.f32.xlu0 %v466
  %v536 = vpop.xlane.xlu0 %535
  %537 = vmax.xlane.f32.xlu0 %v469
  %v538 = vpop.xlane.xlu0 %537
  %539 = vmax.xlane.f32.xlu0 %v474
  %v540 = vpop.xlane.xlu0 %539
  %541 = vmax.xlane.f32.xlu0 %v477
  %v542 = vpop.xlane.xlu0 %541
  %543 = vmax.xlane.f32.xlu0 %v482
  %v544 = vpop.xlane.xlu0 %543
  %545 = vmax.xlane.f32.xlu0 %v485
  %v546 = vpop.xlane.xlu0 %545
  %547 = vmax.xlane.f32.xlu0 %v490
  %v548 = vpop.xlane.xlu0 %547
  %549 = vmax.xlane.f32.xlu0 %v493
  %v550 = vpop.xlane.xlu0 %549
  %551 = vmax.xlane.f32.xlu0 %v498
  %v552 = vpop.xlane.xlu0 %551
  %v553 = vsub.f32 %v402, %v504
  %v554 = vsub.f32 %v405, %v506
  %v555 = vsub.f32 %v410, %v508
  %v556 = vsub.f32 %v413, %v510
  %v557 = vsub.f32 %v418, %v512
  %v558 = vsub.f32 %v421, %v514
  %v559 = vsub.f32 %v426, %v516
  %v560 = vsub.f32 %v429, %v518
  %v561 = vsub.f32 %v434, %v520
  %v562 = vsub.f32 %v437, %v522
  %v563 = vsub.f32 %v442, %v524
  %v564 = vsub.f32 %v445, %v526
  %v565 = vsub.f32 %v450, %v528
  %v566 = vsub.f32 %v453, %v530
  %v567 = vsub.f32 %v458, %v532
  %v568 = vsub.f32 %v461, %v534
  %v569 = vsub.f32 %v466, %v536
  %v570 = vsub.f32 %v469, %v538
  %v571 = vsub.f32 %v474, %v540
  %v572 = vsub.f32 %v477, %v542
  %v573 = vsub.f32 %v482, %v544
  %v574 = vsub.f32 %v485, %v546
  %v575 = vsub.f32 %v490, %v548
  %v576 = vsub.f32 %v493, %v550
  %v577 = vsub.f32 %v498, %v552
  %v578 = vmul.f32 %v553, 1.442695
  %v579 = vpow.pop %v578
  %v580 = vmul.f32 %v554, 1.442695
  %v581 = vpow.pop %v580
  %v582 = vmul.f32 %v555, 1.442695
  %v583 = vpow.pop %v582
  %v584 = vmul.f32 %v556, 1.442695
  %v585 = vpow.pop %v584
  %v586 = vmul.f32 %v557, 1.442695
  %v587 = vpow.pop %v586
  %v588 = vmul.f32 %v558, 1.442695
  %v589 = vpow.pop %v588
  %v590 = vmul.f32 %v559, 1.442695
  %v591 = vpow.pop %v590
  %v592 = vmul.f32 %v560, 1.442695
  %v593 = vpow.pop %v592
  %v594 = vmul.f32 %v561, 1.442695
  %v595 = vpow.pop %v594
  %v596 = vmul.f32 %v562, 1.442695
  %v597 = vpow.pop %v596
  %v598 = vmul.f32 %v563, 1.442695
  %v599 = vpow.pop %v598
  %v600 = vmul.f32 %v564, 1.442695
  %v601 = vpow.pop %v600
  %v602 = vmul.f32 %v565, 1.442695
  %v603 = vpow.pop %v602
  %v604 = vmul.f32 %v566, 1.442695
  %v605 = vpow.pop %v604
  %v606 = vmul.f32 %v567, 1.442695
  %v607 = vpow.pop %v606
  %v608 = vmul.f32 %v568, 1.442695
  %v609 = vpow.pop %v608
  %v610 = vmul.f32 %v569, 1.442695
  %v611 = vpow.pop %v610
  %v612 = vmul.f32 %v570, 1.442695
  %v613 = vpow.pop %v612
  %v614 = vmul.f32 %v571, 1.442695
  %v615 = vpow.pop %v614
  %v616 = vmul.f32 %v572, 1.442695
  %v617 = vpow.pop %v616
  %v618 = vmul.f32 %v573, 1.442695
  %v619 = vpow.pop %v618
  %v620 = vmul.f32 %v574, 1.442695
  %v621 = vpow.pop %v620
  %v622 = vmul.f32 %v575, 1.442695
  %v623 = vpow.pop %v622
  %v624 = vmul.f32 %v576, 1.442695
  %v625 = vpow.pop %v624
  %v626 = vmul.f32 %v577, 1.442695
  %v627 = vpow.pop %v626
  %628 = vadd.xlane.f32.xlu0 %v579
  %v629 = vpop.xlane.xlu0 %628
  %630 = vadd.xlane.f32.xlu0 %v581
  %v631 = vpop.xlane.xlu0 %630
  %632 = vadd.xlane.f32.xlu0 %v583
  %v633 = vpop.xlane.xlu0 %632
  %634 = vadd.xlane.f32.xlu0 %v585
  %v635 = vpop.xlane.xlu0 %634
  %636 = vadd.xlane.f32.xlu0 %v587
  %v637 = vpop.xlane.xlu0 %636
  %638 = vadd.xlane.f32.xlu0 %v589
  %v639 = vpop.xlane.xlu0 %638
  %640 = vadd.xlane.f32.xlu0 %v591
  %v641 = vpop.xlane.xlu0 %640
  %642 = vadd.xlane.f32.xlu0 %v593
  %v643 = vpop.xlane.xlu0 %642
  %644 = vadd.xlane.f32.xlu0 %v595
  %v645 = vpop.xlane.xlu0 %644
  %646 = vadd.xlane.f32.xlu0 %v597
  %v647 = vpop.xlane.xlu0 %646
  %648 = vadd.xlane.f32.xlu0 %v599
  %v649 = vpop.xlane.xlu0 %648
  %650 = vadd.xlane.f32.xlu0 %v601
  %v651 = vpop.xlane.xlu0 %650
  %652 = vadd.xlane.f32.xlu0 %v603
  %v653 = vpop.xlane.xlu0 %652
  %654 = vadd.xlane.f32.xlu0 %v605
  %v655 = vpop.xlane.xlu0 %654
  %656 = vadd.xlane.f32.xlu0 %v607
  %v657 = vpop.xlane.xlu0 %656
  %658 = vadd.xlane.f32.xlu0 %v609
  %v659 = vpop.xlane.xlu0 %658
  %660 = vadd.xlane.f32.xlu0 %v611
  %v661 = vpop.xlane.xlu0 %660
  %662 = vadd.xlane.f32.xlu0 %v613
  %v663 = vpop.xlane.xlu0 %662
  %664 = vadd.xlane.f32.xlu0 %v615
  %v665 = vpop.xlane.xlu0 %664
  %666 = vadd.xlane.f32.xlu0 %v617
  %v667 = vpop.xlane.xlu0 %666
  %668 = vadd.xlane.f32.xlu0 %v619
  %v669 = vpop.xlane.xlu0 %668
  %670 = vadd.xlane.f32.xlu0 %v621
  %v671 = vpop.xlane.xlu0 %670
  %672 = vadd.xlane.f32.xlu0 %v623
  %v673 = vpop.xlane.xlu0 %672
  %674 = vadd.xlane.f32.xlu0 %v625
  %v675 = vpop.xlane.xlu0 %674
  %676 = vadd.xlane.f32.xlu0 %v627
  %v677 = vpop.xlane.xlu0 %676
  %v678 = vrcp.pop %v629
  %v679 = vrcp.pop %v631
  %v680 = vrcp.pop %v633
  %v681 = vrcp.pop %v635
  %v682 = vrcp.pop %v637
  %v683 = vrcp.pop %v639
  %v684 = vrcp.pop %v641
  %v685 = vrcp.pop %v643
  %v686 = vrcp.pop %v645
  %v687 = vrcp.pop %v647
  %v688 = vrcp.pop %v649
  %v689 = vrcp.pop %v651
  %v690 = vrcp.pop %v653
  %v691 = vrcp.pop %v655
  %v692 = vrcp.pop %v657
  %v693 = vrcp.pop %v659
  %v694 = vrcp.pop %v661
  %v695 = vrcp.pop %v663
  %v696 = vrcp.pop %v665
  %v697 = vrcp.pop %v667
  %v698 = vrcp.pop %v669
  %v699 = vrcp.pop %v671
  %v700 = vrcp.pop %v673
  %v701 = vrcp.pop %v675
  %v702 = vrcp.pop %v677
  %v703 = vmul.f32 %v579, %v678
  %v704 = vmul.f32 %v581, %v679
  %v705 = vmul.f32 %v583, %v680
  %v706 = vmul.f32 %v585, %v681
  %v707 = vmul.f32 %v587, %v682
  %v708 = vmul.f32 %v589, %v683
  %v709 = vmul.f32 %v591, %v684
  %v710 = vmul.f32 %v593, %v685
  %v711 = vmul.f32 %v595, %v686
  %v712 = vmul.f32 %v597, %v687
  %v713 = vmul.f32 %v599, %v688
  %v714 = vmul.f32 %v601, %v689
  %v715 = vmul.f32 %v603, %v690
  %v716 = vmul.f32 %v605, %v691
  %v717 = vmul.f32 %v607, %v692
  %v718 = vmul.f32 %v609, %v693
  %v719 = vmul.f32 %v611, %v694
  %v720 = vmul.f32 %v613, %v695
  %v721 = vmul.f32 %v615, %v696
  %v722 = vmul.f32 %v617, %v697
  %v723 = vmul.f32 %v619, %v698
  %v724 = vmul.f32 %v621, %v699
  %v725 = vmul.f32 %v623, %v700
  %v726 = vmul.f32 %v625, %v701
  %v727 = vmul.f32 %v627, %v702
  %v728 = vpack.c.bf16 %v704, %v703
  %v729 = vpack.c.bf16 %v706, %v705
  %v730 = vpack.c.bf16 %v708, %v707
  %v731 = vpack.c.bf16 %v710, %v709
  %v732 = vpack.c.bf16 %v712, %v711
  %v733 = vpack.c.bf16 %v714, %v713
  %v734 = vpack.c.bf16 %v716, %v715
  %v735 = vpack.c.bf16 %v718, %v717
  %v736 = vpack.c.bf16 %v720, %v719
  %v737 = vpack.c.bf16 %v722, %v721
  %v738 = vpack.c.bf16 %v724, %v723
  %v739 = vpack.c.bf16 %v726, %v725
  %v740 = vpack.c.bf16 %v727, %v727
  %v754 = vunpack.c.l.b16 %v728
  %v755 = vunpack.c.h.b16 %v728
  %v756 = vunpack.c.l.b16 %v729
  %v757 = vunpack.c.h.b16 %v729
  %v758 = vunpack.c.l.b16 %v730
  %v759 = vunpack.c.h.b16 %v730
  %v760 = vunpack.c.l.b16 %v731
  %v761 = vunpack.c.h.b16 %v731
  %v762 = vunpack.c.l.b16 %v732
  %v763 = vunpack.c.h.b16 %v732
  %v764 = vunpack.c.l.b16 %v733
  %v765 = vunpack.c.h.b16 %v733
  %v766 = vunpack.c.l.b16 %v734
  %v767 = vunpack.c.h.b16 %v734
  %v768 = vunpack.c.l.b16 %v735
  %v769 = vunpack.c.h.b16 %v735
  %v770 = vunpack.c.l.b16 %v736
  %v771 = vunpack.c.h.b16 %v736
  %v772 = vunpack.c.l.b16 %v737
  %v773 = vunpack.c.h.b16 %v737
  %v774 = vunpack.c.l.b16 %v738
  %v775 = vunpack.c.h.b16 %v738
  %v776 = vunpack.c.l.b16 %v739
  %v777 = vunpack.c.h.b16 %v739
  %v778 = vunpack.c.l.b16 %v740
  %v779 = vpack.c.b16 %v754, %v754
  %v780 = vpack.c.b16 %v755, %v755
  %v781 = vpack.c.b16 %v756, %v756
  %v782 = vpack.c.b16 %v757, %v757
  %v783 = vpack.c.b16 %v758, %v758
  %v784 = vpack.c.b16 %v759, %v759
  %v785 = vpack.c.b16 %v760, %v760
  %v786 = vpack.c.b16 %v761, %v761
  %v787 = vpack.c.b16 %v762, %v762
  %v788 = vpack.c.b16 %v763, %v763
  %v789 = vpack.c.b16 %v764, %v764
  %v790 = vpack.c.b16 %v765, %v765
  %v791 = vpack.c.b16 %v766, %v766
  %v792 = vpack.c.b16 %v767, %v767
  %v793 = vpack.c.b16 %v768, %v768
  %v794 = vpack.c.b16 %v769, %v769
  %v795 = vpack.c.b16 %v770, %v770
  %v796 = vpack.c.b16 %v771, %v771
  %v797 = vpack.c.b16 %v772, %v772
  %v798 = vpack.c.b16 %v773, %v773
  %v799 = vpack.c.b16 %v774, %v774
  %v800 = vpack.c.b16 %v775, %v775
  %v801 = vpack.c.b16 %v776, %v776
  %v802 = vpack.c.b16 %v777, %v777
  %v803 = vpack.c.b16 %v778, %v778
  %829 = vst [vmem:[%s5] sm:$0xf] %v779
  %830 = vst [vmem:[%s5 + $0x4] sm:$0xf] %v780
  %831 = vst [vmem:[%s5 + $0x8] sm:$0xf] %v781
  %832 = vst [vmem:[%s5 + $0xc] sm:$0xf] %v782
  %833 = vst [vmem:[%s5 + $0x10] sm:$0xf] %v783
  %834 = vst [vmem:[%s5 + $0x14] sm:$0xf] %v784
  %835 = vst [vmem:[%s5 + $0x18] sm:$0xf] %v785
  %836 = vst [vmem:[%s5 + $0x1c] sm:$0xf] %v786
  %837 = vst [vmem:[%s5 + $0x20] sm:$0xf] %v787
  %838 = vst [vmem:[%s5 + $0x24] sm:$0xf] %v788
  %839 = vst [vmem:[%s5 + $0x28] sm:$0xf] %v789
  %840 = vst [vmem:[%s5 + $0x2c] sm:$0xf] %v790
  %841 = vst [vmem:[%s5 + $0x30] sm:$0xf] %v791
  %842 = vst [vmem:[%s5 + $0x34] sm:$0xf] %v792
  %843 = vst [vmem:[%s5 + $0x38] sm:$0xf] %v793
  %844 = vst [vmem:[%s5 + $0x3c] sm:$0xf] %v794
  %845 = vst [vmem:[%s5 + $0x40] sm:$0xf] %v795
  %846 = vst [vmem:[%s5 + $0x44] sm:$0xf] %v796
  %847 = vst [vmem:[%s5 + $0x48] sm:$0xf] %v797
  %848 = vst [vmem:[%s5 + $0x4c] sm:$0xf] %v798
  %849 = vst [vmem:[%s5 + $0x50] sm:$0xf] %v799
  %850 = vst [vmem:[%s5 + $0x54] sm:$0xf] %v800
  %851 = vst [vmem:[%s5 + $0x58] sm:$0xf] %v801
  %852 = vst [vmem:[%s5 + $0x5c] sm:$0xf] %v802
  %853 = vst [vmem:[%s5 + $0x60] sm:$0xf] %v803
  // Predicated region
  $region22: #{mlp_forward.1} parent=0 // pred_check
    _
  $region23: #{mlp_forward.1} parent=0 // pred_check_branch
    %855 = sbr.rel (0) target = $region25
  $region24: #{mlp_forward.1} parent=0 // pred_region
    _
  $region25: #{mlp_forward.1} parent=0 // pred_fallthru
    _
  // Predicated region
  $region26: #{mlp_forward.1} parent=0 // pred_check
    _
  $region27: #{mlp_forward.1} parent=0 // pred_check_branch
    %857 = sbr.rel (0) target = $region29
  $region28: #{mlp_forward.1} parent=0 // pred_region
    _
  $region29: #{mlp_forward.1} parent=0 // pred_fallthru
    _

</llo_original>
